<compile_context>
chip_gen: v6e
topology: v6e:2x2x1
jax: 0.10.0
libtpu: 0.0.40
codegen_flags: <defaults>
</compile_context>

<pallas_src>
import functools

import jax
import jax.numpy as jnp
from jax.experimental import pallas as pl
from jax.experimental.pallas import tpu as pltpu

LANE = 128      # lane width of a vreg (last dim)
SUBLANE = 8     # sublane count (second-to-last dim)


def _round_up(n, m):
    return ((n + m - 1) // m) * m


def _nn1_fused_kernel(x_ref, w_in_ref, b_in_ref, w_hid_ref, b_hid_ref,
                      w_out_ref, b_out_ref, o_ref, *, depth):
    """Whole MLP in a single kernel.

    Activations live in vregs ((M, 128) tiles), weights are VMEM-resident,
    only x is read from HBM and only y is written back.
    """
    # First layer: tanh(x @ W0 + b0)
    h = jnp.tanh(
        jnp.dot(x_ref[...], w_in_ref[...], preferred_element_type=jnp.float32)
        + b_in_ref[...])
    # Hidden layers: statically unrolled (depth is a small compile-time const).
    for d in range(depth):
        h = jnp.tanh(
            jnp.dot(h, w_hid_ref[d], preferred_element_type=jnp.float32)
            + b_hid_ref[d])
    # Output layer: NO tanh (matches final nn.Linear in NN1).
    y = (jnp.dot(h, w_out_ref[...], preferred_element_type=jnp.float32)
         + b_out_ref[...])
    o_ref[...] = y.astype(o_ref.dtype)


def init_nn1_params(key, in_N, width, depth, out_N):
    """Deterministic init mirroring nn.Linear's U(-1/sqrt(fan_in), 1/sqrt(fan_in)).

    Weights are stored as (in_features, out_features) so y = x @ W + b.
    """
    layer_dims = [(in_N, width)] + [(width, width)] * depth + [(width, out_N)]
    params = []
    for fan_in, fan_out in layer_dims:
        key, kw, kb = jax.random.split(key, 3)
        bound = 1.0 / float(fan_in) ** 0.5
        W = jax.random.uniform(kw, (fan_in, fan_out), jnp.float32, -bound, bound)
        b = jax.random.uniform(kb, (fan_out,), jnp.float32, -bound, bound)
        params.append((W, b))
    return params


def pack_nn1_params(params, in_N, width, depth, out_N):
    """Zero-pad every feature dim to a lane-dense multiple of 128 and stack
    the hidden (width,width) layers into one (depth, P, P) array."""
    P = _round_up(max(in_N, width, out_N), LANE)

    def pad_w(W):
        k, n = W.shape
        return jnp.zeros((P, P), jnp.float32).at[:k, :n].set(W)

    def pad_b(b):
        n = b.shape[0]
        return jnp.zeros((1, P), jnp.float32).at[0, :n].set(b)

    w_in, b_in = pad_w(params[0][0]), pad_b(params[0][1])
    if depth > 0:
        w_hid = jnp.stack([pad_w(params[1 + d][0]) for d in range(depth)])
        b_hid = jnp.stack([pad_b(params[1 + d][1]) for d in range(depth)])
    else:  # keep array ranks stable even when there are no hidden layers
        w_hid = jnp.zeros((1, P, P), jnp.float32)
        b_hid = jnp.zeros((1, 1, P), jnp.float32)
    w_out, b_out = pad_w(params[-1][0]), pad_b(params[-1][1])
    return {"w_in": w_in, "b_in": b_in,
            "w_hid": w_hid, "b_hid": b_hid,
            "w_out": w_out, "b_out": b_out}


def nn1_forward(x, packed, *, in_N, out_N, depth):
    """Fused NN1 forward: one pallas_call for the whole network."""
    P = packed["w_in"].shape[0]
    batch = x.shape[0]
    Mp = _round_up(max(batch, SUBLANE), SUBLANE)

    # Lane-dense, sublane-aligned input slab (zero padding keeps math exact).
    x_pad = jnp.zeros((Mp, P), jnp.float32).at[:batch, :in_N].set(
        x.astype(jnp.float32))

    vmem = pl.BlockSpec(memory_space=pltpu.MemorySpace.VMEM)  # whole array, resident
    kernel = functools.partial(_nn1_fused_kernel, depth=depth)

    # Total VMEM footprint at P=128: ~(depth+2)*64 KiB of weights + a few KiB of
    # activations — tiny on every generation (v5e/v6e 128 MiB, v7x 64 MiB).
    # TODO(synk): for large batch, add a batch grid axis with
    # dimension_semantics=("parallel",) so v7x's two TensorCores split it.
    y_pad = pl.pallas_call(
        kernel,
        out_shape=jax.ShapeDtypeStruct((Mp, P), jnp.float32),
        in_specs=[vmem] * 7,
        out_specs=vmem,
    )(x_pad, packed["w_in"], packed["b_in"], packed["w_hid"], packed["b_hid"],
      packed["w_out"], packed["b_out"])

    return y_pad[:batch, :out_N]


if __name__ == "__main__":
    # Shapes consistent with the module: NN1(in_N=4, width=32, depth=3, out_N=2)
    in_N, width, depth, out_N = 4, 32, 3, 2
    batch = 8

    key = jax.random.PRNGKey(0)
    key, kx = jax.random.split(key)
    x = jax.random.normal(kx, (batch, in_N), dtype=jnp.float32)

    params = init_nn1_params(key, in_N, width, depth, out_N)
    packed = pack_nn1_params(params, in_N, width, depth, out_N)

    fwd = jax.jit(functools.partial(nn1_forward, in_N=in_N, out_N=out_N,
                                    depth=depth))
    y = fwd(x, packed)
    jax.block_until_ready(y)

    # Sanity check against a pure-JAX reference of the same (unpadded) math.
    ref = x
    for i, (W, b) in enumerate(params):
        ref = ref @ W + b
        if i < len(params) - 1:
            ref = jnp.tanh(ref)
    assert y.shape == (batch, out_N)
    assert jnp.allclose(y, ref, atol=1e-5, rtol=1e-5)

    print("KERNEL_OK")
</pallas_src>

<mosaic_0001>
module attributes {stable_mosaic.version = 11 : i64} {
  func.func @_nn1_fused_kernel(%arg0: memref<8x128xf32, #tpu.memory_space<vmem>>, %arg1: memref<128x128xf32, #tpu.memory_space<vmem>>, %arg2: memref<1x128xf32, #tpu.memory_space<vmem>>, %arg3: memref<3x128x128xf32, #tpu.memory_space<vmem>>, %arg4: memref<3x1x128xf32, #tpu.memory_space<vmem>>, %arg5: memref<128x128xf32, #tpu.memory_space<vmem>>, %arg6: memref<1x128xf32, #tpu.memory_space<vmem>>, %arg7: memref<8x128xf32, #tpu.memory_space<vmem>>) attributes {dimension_semantics = [], scalar_prefetch = 0 : i64, scratch_operands = 0 : i64, tpu.core_type = #tpu.core_type<tc>} {
    %c0 = arith.constant 0 : index
    %c0_0 = arith.constant 0 : index
    %0 = vector.load %arg0[%c0, %c0_0] : memref<8x128xf32, #tpu.memory_space<vmem>>, vector<8x128xf32>
    %c0_1 = arith.constant 0 : index
    %c0_2 = arith.constant 0 : index
    %1 = vector.load %arg1[%c0_1, %c0_2] : memref<128x128xf32, #tpu.memory_space<vmem>>, vector<128x128xf32>
    %cst = arith.constant dense<0.000000e+00> : vector<8x128xf32>
    %2 = tpu.matmul %0, %1, %cst {dimension_numbers = #tpu.dot_dimension_numbers<[1], [0], [0], [1], [0, 0, 1, 1], [], []>} : vector<8x128xf32>, vector<128x128xf32>, vector<8x128xf32> -> vector<8x128xf32>
    %c0_3 = arith.constant 0 : index
    %c0_4 = arith.constant 0 : index
    %3 = vector.load %arg2[%c0_3, %c0_4] : memref<1x128xf32, #tpu.memory_space<vmem>>, vector<1x128xf32>
    %4 = vector.broadcast %3 : vector<1x128xf32> to vector<8x128xf32>
    %5 = arith.addf %2, %4 : vector<8x128xf32>
    %6 = math.tanh %5 : vector<8x128xf32>
    %c0_5 = arith.constant 0 : index
    %c0_6 = arith.constant 0 : index
    %c0_7 = arith.constant 0 : index
    %7 = vector.load %arg3[%c0_5, %c0_6, %c0_7] : memref<3x128x128xf32, #tpu.memory_space<vmem>>, vector<1x128x128xf32>
    %8 = vector.shape_cast %7 : vector<1x128x128xf32> to vector<128x128xf32>
    %cst_8 = arith.constant dense<0.000000e+00> : vector<8x128xf32>
    %9 = tpu.matmul %6, %8, %cst_8 {dimension_numbers = #tpu.dot_dimension_numbers<[1], [0], [0], [1], [0, 0, 1, 1], [], []>} : vector<8x128xf32>, vector<128x128xf32>, vector<8x128xf32> -> vector<8x128xf32>
    %c0_9 = arith.constant 0 : index
    %c0_10 = arith.constant 0 : index
    %c0_11 = arith.constant 0 : index
    %10 = vector.load %arg4[%c0_9, %c0_10, %c0_11] : memref<3x1x128xf32, #tpu.memory_space<vmem>>, vector<1x1x128xf32>
    %11 = vector.shape_cast %10 : vector<1x1x128xf32> to vector<1x128xf32>
    %12 = vector.broadcast %11 : vector<1x128xf32> to vector<8x128xf32>
    %13 = arith.addf %9, %12 : vector<8x128xf32>
    %14 = math.tanh %13 : vector<8x128xf32>
    %c1 = arith.constant 1 : index
    %c0_12 = arith.constant 0 : index
    %c0_13 = arith.constant 0 : index
    %15 = vector.load %arg3[%c1, %c0_12, %c0_13] : memref<3x128x128xf32, #tpu.memory_space<vmem>>, vector<1x128x128xf32>
    %16 = vector.shape_cast %15 : vector<1x128x128xf32> to vector<128x128xf32>
    %cst_14 = arith.constant dense<0.000000e+00> : vector<8x128xf32>
    %17 = tpu.matmul %14, %16, %cst_14 {dimension_numbers = #tpu.dot_dimension_numbers<[1], [0], [0], [1], [0, 0, 1, 1], [], []>} : vector<8x128xf32>, vector<128x128xf32>, vector<8x128xf32> -> vector<8x128xf32>
    %c1_15 = arith.constant 1 : index
    %c0_16 = arith.constant 0 : index
    %c0_17 = arith.constant 0 : index
    %18 = vector.load %arg4[%c1_15, %c0_16, %c0_17] : memref<3x1x128xf32, #tpu.memory_space<vmem>>, vector<1x1x128xf32>
    %19 = vector.shape_cast %18 : vector<1x1x128xf32> to vector<1x128xf32>
    %20 = vector.broadcast %19 : vector<1x128xf32> to vector<8x128xf32>
    %21 = arith.addf %17, %20 : vector<8x128xf32>
    %22 = math.tanh %21 : vector<8x128xf32>
    %c2 = arith.constant 2 : index
    %c0_18 = arith.constant 0 : index
    %c0_19 = arith.constant 0 : index
    %23 = vector.load %arg3[%c2, %c0_18, %c0_19] : memref<3x128x128xf32, #tpu.memory_space<vmem>>, vector<1x128x128xf32>
    %24 = vector.shape_cast %23 : vector<1x128x128xf32> to vector<128x128xf32>
    %cst_20 = arith.constant dense<0.000000e+00> : vector<8x128xf32>
    %25 = tpu.matmul %22, %24, %cst_20 {dimension_numbers = #tpu.dot_dimension_numbers<[1], [0], [0], [1], [0, 0, 1, 1], [], []>} : vector<8x128xf32>, vector<128x128xf32>, vector<8x128xf32> -> vector<8x128xf32>
    %c2_21 = arith.constant 2 : index
    %c0_22 = arith.constant 0 : index
    %c0_23 = arith.constant 0 : index
    %26 = vector.load %arg4[%c2_21, %c0_22, %c0_23] : memref<3x1x128xf32, #tpu.memory_space<vmem>>, vector<1x1x128xf32>
    %27 = vector.shape_cast %26 : vector<1x1x128xf32> to vector<1x128xf32>
    %28 = vector.broadcast %27 : vector<1x128xf32> to vector<8x128xf32>
    %29 = arith.addf %25, %28 : vector<8x128xf32>
    %30 = math.tanh %29 : vector<8x128xf32>
    %c0_24 = arith.constant 0 : index
    %c0_25 = arith.constant 0 : index
    %31 = vector.load %arg5[%c0_24, %c0_25] : memref<128x128xf32, #tpu.memory_space<vmem>>, vector<128x128xf32>
    %cst_26 = arith.constant dense<0.000000e+00> : vector<8x128xf32>
    %32 = tpu.matmul %30, %31, %cst_26 {dimension_numbers = #tpu.dot_dimension_numbers<[1], [0], [0], [1], [0, 0, 1, 1], [], []>} : vector<8x128xf32>, vector<128x128xf32>, vector<8x128xf32> -> vector<8x128xf32>
    %c0_27 = arith.constant 0 : index
    %c0_28 = arith.constant 0 : index
    %33 = vector.load %arg6[%c0_27, %c0_28] : memref<1x128xf32, #tpu.memory_space<vmem>>, vector<1x128xf32>
    %34 = vector.broadcast %33 : vector<1x128xf32> to vector<8x128xf32>
    %35 = arith.addf %32, %34 : vector<8x128xf32>
    %c0_29 = arith.constant 0 : index
    %c0_30 = arith.constant 0 : index
    %36 = vector.load %arg7[%c0_29, %c0_30] : memref<8x128xf32, #tpu.memory_space<vmem>>, vector<8x128xf32>
    tpu.vector_store %arg7[%c0_29, %c0_30], %35 {strides = array<i32>} : memref<8x128xf32, #tpu.memory_space<vmem>>, vector<8x128xf32>,
    return
  }
}

</mosaic_0001>

<llo_original>
// kernel: nn1_forward.1
$region0: #{nn1_forward.1}
  #allocation0 [shape = 'u32[]', space=smem, size = 0x4, offset = 0x4, fixed_abs, tag = 'smem constant byte address 0x4 - core index']
  #allocation1 [shape = 'u32[144,128]{1,0:T(1,128)}', space=vmem, size = 0x12000, scoped, tag = 'internal scratch']
  %s0 = inlined_call_operand.vmem [shape: f32[8,128], index: 0, kind: input, shape index: {}]
  %s1 = inlined_call_operand.hbm [shape: f32[128,128], index: 1, kind: input, shape index: {}]
  %s2 = inlined_call_operand.vmem [shape: f32[1,128], index: 2, kind: input, shape index: {}]
  %s3 = inlined_call_operand.hbm [shape: f32[3,128,128], index: 3, kind: input, shape index: {}]
  %s4 = inlined_call_operand.vmem [shape: f32[3,1,128], index: 4, kind: input, shape index: {}]
  %s5 = inlined_call_operand.hbm [shape: f32[128,128], index: 5, kind: input, shape index: {}]
  %s6 = inlined_call_operand.vmem [shape: f32[1,128], index: 6, kind: input, shape index: {}]
  %s7 = inlined_call_operand.vmem [shape: f32[8,128], index: 7, kind: output, shape index: {}]
  %s8 = sld [smem:[#allocation0]]
  $region50: #{nn1_forward.1} parent=0
    _
  %s10 = ssub.s32 1, %s8
  %s11 = scalar_select 0, %s10, %s8
  $region1: #{nn1_forward.1} parent=0
    #allocation2 [shape = 'u8[65536]{0}', space=vmem, size = 0x10000, scoped, tag = 'input window, operand 1, single buffered']
    #allocation3 [shape = 's32[1]{0}', space=sflag, size = 0x4, scoped, tag = 'scoped memory for nn1_forward.1']
    #allocation4 [shape = 'u8[196608]{0}', space=vmem, size = 0x30000, scoped, tag = 'input window, operand 3, single buffered']
    #allocation5 [shape = 's32[1]{0}', space=sflag, size = 0x4, scoped, tag = 'scoped memory for nn1_forward.1']
    #allocation6 [shape = 'u8[65536]{0}', space=vmem, size = 0x10000, scoped, tag = 'input window, operand 5, single buffered']
    %12 = vsyncpa [#allocation3], 0
    %13 = vsyncpa [#allocation5], 0
    // Predicated region
    $region2: #{nn1_forward.1} parent=1 // pred_check
      _
    $region3: #{nn1_forward.1} parent=1 // pred_check_branch
      %15 = sbr.rel (0) target = $region5
    $region4: #{nn1_forward.1} parent=1 // pred_region
      _
    $region5: #{nn1_forward.1} parent=1 // pred_fallthru
      _
    // Predicated region
    $region6: #{nn1_forward.1} parent=1 // pred_check
      _
    $region7: #{nn1_forward.1} parent=1 // pred_check_branch
      %17 = sbr.rel (0) target = $region9
    $region8: #{nn1_forward.1} parent=1 // pred_region
      %s19 = ssub.s32 2048, 2048
      %20 = vsyncadd [#allocation3], %s19
      %s21 = sshll.u32 [#allocation2], 4
      %s22 = int_to_ptr.vmem [resolvable:$true] %s21
      %27 = dma.hbm_to_vmem [thread:$0]  %s1, 2048, %s22, [#allocation3], 128, 128, 8
    $region9: #{nn1_forward.1} parent=1 // pred_fallthru
      _
    // Predicated region
    $region10: #{nn1_forward.1} parent=1 // pred_check
      _
    $region11: #{nn1_forward.1} parent=1 // pred_check_branch
      %29 = sbr.rel (0) target = $region13
    $region12: #{nn1_forward.1} parent=1 // pred_region
      _
    $region13: #{nn1_forward.1} parent=1 // pred_fallthru
      _
    // Predicated region
    $region14: #{nn1_forward.1} parent=1 // pred_check
      _
    $region15: #{nn1_forward.1} parent=1 // pred_check_branch
      %31 = sbr.rel (0) target = $region17
    $region16: #{nn1_forward.1} parent=1 // pred_region
      %s33 = ssub.s32 6144, 6144
      %34 = vsyncadd [#allocation5], %s33
      %s35 = sshll.u32 [#allocation4], 4
      %s36 = int_to_ptr.vmem [resolvable:$true] %s35
      %41 = dma.hbm_to_vmem [thread:$0]  %s3, 6144, %s36, [#allocation5], 128, 128, 8
    $region17: #{nn1_forward.1} parent=1 // pred_fallthru
      _
    // Predicated region
    $region18: #{nn1_forward.1} parent=1 // pred_check
      _
    $region19: #{nn1_forward.1} parent=1 // pred_check_branch
      %43 = sbr.rel (0) target = $region21
    $region20: #{nn1_forward.1} parent=1 // pred_region
      _
    $region21: #{nn1_forward.1} parent=1 // pred_fallthru
      _
    // Predicated region
    $region22: #{nn1_forward.1} parent=1 // pred_check
      _
    $region23: #{nn1_forward.1} parent=1 // pred_check_branch
      %45 = sbr.rel (0) target = $region25
    $region24: #{nn1_forward.1} parent=1 // pred_region
      %s47 = ssub.s32 2048, 2048
      %48 = vsyncadd [#allocation5], %s47
      %s49 = sshll.u32 [#allocation6], 4
      %s50 = int_to_ptr.vmem [resolvable:$true] %s49
      %55 = dma.hbm_to_vmem [thread:$0]  %s5, 2048, %s50, [#allocation5], 128, 128, 8
    $region25: #{nn1_forward.1} parent=1 // pred_fallthru
      _
    // Predicated region
    $region26: #{nn1_forward.1} parent=1 // pred_check
      _
    $region27: #{nn1_forward.1} parent=1 // pred_check_branch
      %57 = sbr.rel (0) target = $region29
    $region28: #{nn1_forward.1} parent=1 // pred_region
      _
    $region29: #{nn1_forward.1} parent=1 // pred_fallthru
      _
    // Predicated region
    $region30: #{nn1_forward.1} parent=1 // pred_check
      _
    $region31: #{nn1_forward.1} parent=1 // pred_check_branch
      %59 = sbr.rel (0) target = $region33
    $region32: #{nn1_forward.1} parent=1 // pred_region
      %60 = dma.done [#allocation3], 2048
    $region33: #{nn1_forward.1} parent=1 // pred_fallthru
      _
    // Predicated region
    $region34: #{nn1_forward.1} parent=1 // pred_check
      _
    $region35: #{nn1_forward.1} parent=1 // pred_check_branch
      %62 = sbr.rel (0) target = $region37
    $region36: #{nn1_forward.1} parent=1 // pred_region
      %63 = dma.done [#allocation5], 6144
    $region37: #{nn1_forward.1} parent=1 // pred_fallthru
      _
    // Predicated region
    $region38: #{nn1_forward.1} parent=1 // pred_check
      _
    $region39: #{nn1_forward.1} parent=1 // pred_check_branch
      %65 = sbr.rel (0) target = $region41
    $region40: #{nn1_forward.1} parent=1 // pred_region
      %66 = dma.done [#allocation5], 2048
    $region41: #{nn1_forward.1} parent=1 // pred_fallthru
      _
    %v67 = vld [vmem:[%s0] sm:$0xff]
    %v68 = vld [vmem:[#allocation2] sm:$0xff]
    %v69 = vld [vmem:[#allocation2 + $0x8] sm:$0xff]
    %v70 = vld [vmem:[#allocation2 + $0x10] sm:$0xff]
    %v71 = vld [vmem:[#allocation2 + $0x18] sm:$0xff]
    %v72 = vld [vmem:[#allocation2 + $0x20] sm:$0xff]
    %v73 = vld [vmem:[#allocation2 + $0x28] sm:$0xff]
    %v74 = vld [vmem:[#allocation2 + $0x30] sm:$0xff]
    %v75 = vld [vmem:[#allocation2 + $0x38] sm:$0xff]
    %v76 = vld [vmem:[#allocation2 + $0x40] sm:$0xff]
    %v77 = vld [vmem:[#allocation2 + $0x48] sm:$0xff]
    %v78 = vld [vmem:[#allocation2 + $0x50] sm:$0xff]
    %v79 = vld [vmem:[#allocation2 + $0x58] sm:$0xff]
    %v80 = vld [vmem:[#allocation2 + $0x60] sm:$0xff]
    %v81 = vld [vmem:[#allocation2 + $0x68] sm:$0xff]
    %v82 = vld [vmem:[#allocation2 + $0x70] sm:$0xff]
    %v83 = vld [vmem:[#allocation2 + $0x78] sm:$0xff]
    %v84 = vld [vmem:[%s2] sm:$0x1]
    %v86 = vlaneseq
    %v87 = vshrl.u32 %v86, 7
    %v88 = vsub.s32 0, %v87
    %v89 = vrot.slane %v84, %v88
    %91 = vmatprep.subr.mxu0 0.0
    %92 = vmatpush1.msra.mxu0 %v83
    %93 = vmatprep.subr.mxu0 0.0
    %94 = vmatpush1.msra.mxu0 %v82
    %95 = vmatprep.subr.mxu0 0.0
    %96 = vmatpush1.msra.mxu0 %v81
    %97 = vmatprep.subr.mxu0 0.0
    %98 = vmatpush1.msra.mxu0 %v80
    %99 = vmatprep.subr.mxu0 0.0
    %100 = vmatpush1.msra.mxu0 %v79
    %101 = vmatprep.subr.mxu0 0.0
    %102 = vmatpush1.msra.mxu0 %v78
    %103 = vmatprep.subr.mxu0 0.0
    %104 = vmatpush1.msra.mxu0 %v77
    %105 = vmatprep.subr.mxu0 0.0
    %106 = vmatpush1.msra.mxu0 %v76
    %107 = vmatprep.subr.mxu0 0.0
    %108 = vmatpush1.msra.mxu0 %v75
    %109 = vmatprep.subr.mxu0 0.0
    %110 = vmatpush1.msra.mxu0 %v74
    %111 = vmatprep.subr.mxu0 0.0
    %112 = vmatpush1.msra.mxu0 %v73
    %113 = vmatprep.subr.mxu0 0.0
    %114 = vmatpush1.msra.mxu0 %v72
    %115 = vmatprep.subr.mxu0 0.0
    %116 = vmatpush1.msra.mxu0 %v71
    %117 = vmatprep.subr.mxu0 0.0
    %118 = vmatpush1.msra.mxu0 %v70
    %119 = vmatprep.subr.mxu0 0.0
    %120 = vmatpush1.msra.mxu0 %v69
    %121 = vmatprep.subr.mxu0 0.0
    %122 = vmatpush1.msra.mxu0 %v68
    %123 = vmatprep.subr.mxu0 0.0
    %124 = vmatpush2.msra.mxu0 0.0
    %125 = vmatprep.subr.mxu0 0.0
    %126 = vmatpush2.msra.mxu0 0.0
    %127 = vmatprep.subr.mxu0 0.0
    %128 = vmatpush2.msra.mxu0 0.0
    %129 = vmatprep.subr.mxu0 0.0
    %130 = vmatpush2.msra.mxu0 0.0
    %131 = vmatprep.subr.mxu0 0.0
    %132 = vmatpush2.msra.mxu0 0.0
    %133 = vmatprep.subr.mxu0 0.0
    %134 = vmatpush2.msra.mxu0 0.0
    %135 = vmatprep.subr.mxu0 0.0
    %136 = vmatpush2.msra.mxu0 0.0
    %137 = vmatprep.subr.mxu0 0.0
    %138 = vmatpush2.msra.mxu0 0.0
    %139 = vmatprep.subr.mxu0 0.0
    %140 = vmatpush2.msra.mxu0 0.0
    %141 = vmatprep.subr.mxu0 0.0
    %142 = vmatpush2.msra.mxu0 0.0
    %143 = vmatprep.subr.mxu0 0.0
    %144 = vmatpush2.msra.mxu0 0.0
    %145 = vmatprep.subr.mxu0 0.0
    %146 = vmatpush2.msra.mxu0 0.0
    %147 = vmatprep.subr.mxu0 0.0
    %148 = vmatpush2.msra.mxu0 0.0
    %149 = vmatprep.subr.mxu0 0.0
    %150 = vmatpush2.msra.mxu0 0.0
    %151 = vmatprep.subr.mxu0 0.0
    %152 = vmatpush2.msra.mxu0 0.0
    %153 = vmatprep.subr.mxu0 0.0
    %154 = vmatpush2.msra.mxu0 0.0
    %155 = vmatprep.mubr.f32.mxu0 0.0
    %156 = vmatmul.mubr.f32.gmra.mxu0 %v67
    %v157 = vpop.f32.mrf.mxu0
    %v158 = vadd.f32 %v89, %v157
    %v159 = vpop.f32.mrf.mxu0
    %160 = vdwg.mxu0
    %v161 = vtanh.pop %v158
    %v162 = vld [vmem:[#allocation4] sm:$0xff]
    %v163 = vld [vmem:[#allocation4 + $0x8] sm:$0xff]
    %v164 = vld [vmem:[#allocation4 + $0x10] sm:$0xff]
    %v165 = vld [vmem:[#allocation4 + $0x18] sm:$0xff]
    %v166 = vld [vmem:[#allocation4 + $0x20] sm:$0xff]
    %v167 = vld [vmem:[#allocation4 + $0x28] sm:$0xff]
    %v168 = vld [vmem:[#allocation4 + $0x30] sm:$0xff]
    %v169 = vld [vmem:[#allocation4 + $0x38] sm:$0xff]
    %v170 = vld [vmem:[#allocation4 + $0x40] sm:$0xff]
    %v171 = vld [vmem:[#allocation4 + $0x48] sm:$0xff]
    %v172 = vld [vmem:[#allocation4 + $0x50] sm:$0xff]
    %v173 = vld [vmem:[#allocation4 + $0x58] sm:$0xff]
    %v174 = vld [vmem:[#allocation4 + $0x60] sm:$0xff]
    %v175 = vld [vmem:[#allocation4 + $0x68] sm:$0xff]
    %v176 = vld [vmem:[#allocation4 + $0x70] sm:$0xff]
    %v177 = vld [vmem:[#allocation4 + $0x78] sm:$0xff]
    %v178 = vld [vmem:[%s4] sm:$0x1]
    %v180 = vlaneseq
    %v181 = vshrl.u32 %v180, 7
    %v182 = vsub.s32 0, %v181
    %v183 = vrot.slane %v178, %v182
    %185 = vmatprep.subr.mxu0 0.0
    %186 = vmatpush1.msra.mxu0 %v177
    %187 = vmatprep.subr.mxu0 0.0
    %188 = vmatpush1.msra.mxu0 %v176
    %189 = vmatprep.subr.mxu0 0.0
    %190 = vmatpush1.msra.mxu0 %v175
    %191 = vmatprep.subr.mxu0 0.0
    %192 = vmatpush1.msra.mxu0 %v174
    %193 = vmatprep.subr.mxu0 0.0
    %194 = vmatpush1.msra.mxu0 %v173
    %195 = vmatprep.subr.mxu0 0.0
    %196 = vmatpush1.msra.mxu0 %v172
    %197 = vmatprep.subr.mxu0 0.0
    %198 = vmatpush1.msra.mxu0 %v171
    %199 = vmatprep.subr.mxu0 0.0
    %200 = vmatpush1.msra.mxu0 %v170
    %201 = vmatprep.subr.mxu0 0.0
    %202 = vmatpush1.msra.mxu0 %v169
    %203 = vmatprep.subr.mxu0 0.0
    %204 = vmatpush1.msra.mxu0 %v168
    %205 = vmatprep.subr.mxu0 0.0
    %206 = vmatpush1.msra.mxu0 %v167
    %207 = vmatprep.subr.mxu0 0.0
    %208 = vmatpush1.msra.mxu0 %v166
    %209 = vmatprep.subr.mxu0 0.0
    %210 = vmatpush1.msra.mxu0 %v165
    %211 = vmatprep.subr.mxu0 0.0
    %212 = vmatpush1.msra.mxu0 %v164
    %213 = vmatprep.subr.mxu0 0.0
    %214 = vmatpush1.msra.mxu0 %v163
    %215 = vmatprep.subr.mxu0 0.0
    %216 = vmatpush1.msra.mxu0 %v162
    %217 = vmatprep.subr.mxu0 0.0
    %218 = vmatpush2.msra.mxu0 0.0
    %219 = vmatprep.subr.mxu0 0.0
    %220 = vmatpush2.msra.mxu0 0.0
    %221 = vmatprep.subr.mxu0 0.0
    %222 = vmatpush2.msra.mxu0 0.0
    %223 = vmatprep.subr.mxu0 0.0
    %224 = vmatpush2.msra.mxu0 0.0
    %225 = vmatprep.subr.mxu0 0.0
    %226 = vmatpush2.msra.mxu0 0.0
    %227 = vmatprep.subr.mxu0 0.0
    %228 = vmatpush2.msra.mxu0 0.0
    %229 = vmatprep.subr.mxu0 0.0
    %230 = vmatpush2.msra.mxu0 0.0
    %231 = vmatprep.subr.mxu0 0.0
    %232 = vmatpush2.msra.mxu0 0.0
    %233 = vmatprep.subr.mxu0 0.0
    %234 = vmatpush2.msra.mxu0 0.0
    %235 = vmatprep.subr.mxu0 0.0
    %236 = vmatpush2.msra.mxu0 0.0
    %237 = vmatprep.subr.mxu0 0.0
    %238 = vmatpush2.msra.mxu0 0.0
    %239 = vmatprep.subr.mxu0 0.0
    %240 = vmatpush2.msra.mxu0 0.0
    %241 = vmatprep.subr.mxu0 0.0
    %242 = vmatpush2.msra.mxu0 0.0
    %243 = vmatprep.subr.mxu0 0.0
    %244 = vmatpush2.msra.mxu0 0.0
    %245 = vmatprep.subr.mxu0 0.0
    %246 = vmatpush2.msra.mxu0 0.0
    %247 = vmatprep.subr.mxu0 0.0
    %248 = vmatpush2.msra.mxu0 0.0
    %249 = vmatprep.mubr.f32.mxu0 0.0
    %250 = vmatmul.mubr.f32.gmra.mxu0 %v161
    %v251 = vpop.f32.mrf.mxu0
    %v252 = vadd.f32 %v183, %v251
    %v253 = vpop.f32.mrf.mxu0
    %254 = vdwg.mxu0
    %v255 = vtanh.pop %v252
    %s256 = scalar_lea.vmem [#allocation4], 128
    %v257 = vld [vmem:[%s256] sm:$0xff]
    %v258 = vld [vmem:[%s256 + $0x8] sm:$0xff]
    %v259 = vld [vmem:[%s256 + $0x10] sm:$0xff]
    %v260 = vld [vmem:[%s256 + $0x18] sm:$0xff]
    %v261 = vld [vmem:[%s256 + $0x20] sm:$0xff]
    %v262 = vld [vmem:[%s256 + $0x28] sm:$0xff]
    %v263 = vld [vmem:[%s256 + $0x30] sm:$0xff]
    %v264 = vld [vmem:[%s256 + $0x38] sm:$0xff]
    %v265 = vld [vmem:[%s256 + $0x40] sm:$0xff]
    %v266 = vld [vmem:[%s256 + $0x48] sm:$0xff]
    %v267 = vld [vmem:[%s256 + $0x50] sm:$0xff]
    %v268 = vld [vmem:[%s256 + $0x58] sm:$0xff]
    %v269 = vld [vmem:[%s256 + $0x60] sm:$0xff]
    %v270 = vld [vmem:[%s256 + $0x68] sm:$0xff]
    %v271 = vld [vmem:[%s256 + $0x70] sm:$0xff]
    %v272 = vld [vmem:[%s256 + $0x78] sm:$0xff]
    %s273 = scalar_lea.vmem %s4, 1
    %v274 = vld [vmem:[%s273] sm:$0x1]
    %v276 = vlaneseq
    %v277 = vshrl.u32 %v276, 7
    %v278 = vsub.s32 0, %v277
    %v279 = vrot.slane %v274, %v278
    %281 = vmatprep.subr.mxu0 0.0
    %282 = vmatpush1.msra.mxu0 %v272
    %283 = vmatprep.subr.mxu0 0.0
    %284 = vmatpush1.msra.mxu0 %v271
    %285 = vmatprep.subr.mxu0 0.0
    %286 = vmatpush1.msra.mxu0 %v270
    %287 = vmatprep.subr.mxu0 0.0
    %288 = vmatpush1.msra.mxu0 %v269
    %289 = vmatprep.subr.mxu0 0.0
    %290 = vmatpush1.msra.mxu0 %v268
    %291 = vmatprep.subr.mxu0 0.0
    %292 = vmatpush1.msra.mxu0 %v267
    %293 = vmatprep.subr.mxu0 0.0
    %294 = vmatpush1.msra.mxu0 %v266
    %295 = vmatprep.subr.mxu0 0.0
    %296 = vmatpush1.msra.mxu0 %v265
    %297 = vmatprep.subr.mxu0 0.0
    %298 = vmatpush1.msra.mxu0 %v264
    %299 = vmatprep.subr.mxu0 0.0
    %300 = vmatpush1.msra.mxu0 %v263
    %301 = vmatprep.subr.mxu0 0.0
    %302 = vmatpush1.msra.mxu0 %v262
    %303 = vmatprep.subr.mxu0 0.0
    %304 = vmatpush1.msra.mxu0 %v261
    %305 = vmatprep.subr.mxu0 0.0
    %306 = vmatpush1.msra.mxu0 %v260
    %307 = vmatprep.subr.mxu0 0.0
    %308 = vmatpush1.msra.mxu0 %v259
    %309 = vmatprep.subr.mxu0 0.0
    %310 = vmatpush1.msra.mxu0 %v258
    %311 = vmatprep.subr.mxu0 0.0
    %312 = vmatpush1.msra.mxu0 %v257
    %313 = vmatprep.subr.mxu0 0.0
    %314 = vmatpush2.msra.mxu0 0.0
    %315 = vmatprep.subr.mxu0 0.0
    %316 = vmatpush2.msra.mxu0 0.0
    %317 = vmatprep.subr.mxu0 0.0
    %318 = vmatpush2.msra.mxu0 0.0
    %319 = vmatprep.subr.mxu0 0.0
    %320 = vmatpush2.msra.mxu0 0.0
    %321 = vmatprep.subr.mxu0 0.0
    %322 = vmatpush2.msra.mxu0 0.0
    %323 = vmatprep.subr.mxu0 0.0
    %324 = vmatpush2.msra.mxu0 0.0
    %325 = vmatprep.subr.mxu0 0.0
    %326 = vmatpush2.msra.mxu0 0.0
    %327 = vmatprep.subr.mxu0 0.0
    %328 = vmatpush2.msra.mxu0 0.0
    %329 = vmatprep.subr.mxu0 0.0
    %330 = vmatpush2.msra.mxu0 0.0
    %331 = vmatprep.subr.mxu0 0.0
    %332 = vmatpush2.msra.mxu0 0.0
    %333 = vmatprep.subr.mxu0 0.0
    %334 = vmatpush2.msra.mxu0 0.0
    %335 = vmatprep.subr.mxu0 0.0
    %336 = vmatpush2.msra.mxu0 0.0
    %337 = vmatprep.subr.mxu0 0.0
    %338 = vmatpush2.msra.mxu0 0.0
    %339 = vmatprep.subr.mxu0 0.0
    %340 = vmatpush2.msra.mxu0 0.0
    %341 = vmatprep.subr.mxu0 0.0
    %342 = vmatpush2.msra.mxu0 0.0
    %343 = vmatprep.subr.mxu0 0.0
    %344 = vmatpush2.msra.mxu0 0.0
    %345 = vmatprep.mubr.f32.mxu0 0.0
    %346 = vmatmul.mubr.f32.gmra.mxu0 %v255
    %v347 = vpop.f32.mrf.mxu0
    %v348 = vadd.f32 %v279, %v347
    %v349 = vpop.f32.mrf.mxu0
    %350 = vdwg.mxu0
    %v351 = vtanh.pop %v348
    %s352 = scalar_lea.vmem [#allocation4], 256
    %v353 = vld [vmem:[%s352] sm:$0xff]
    %v354 = vld [vmem:[%s352 + $0x8] sm:$0xff]
    %v355 = vld [vmem:[%s352 + $0x10] sm:$0xff]
    %v356 = vld [vmem:[%s352 + $0x18] sm:$0xff]
    %v357 = vld [vmem:[%s352 + $0x20] sm:$0xff]
    %v358 = vld [vmem:[%s352 + $0x28] sm:$0xff]
    %v359 = vld [vmem:[%s352 + $0x30] sm:$0xff]
    %v360 = vld [vmem:[%s352 + $0x38] sm:$0xff]
    %v361 = vld [vmem:[%s352 + $0x40] sm:$0xff]
    %v362 = vld [vmem:[%s352 + $0x48] sm:$0xff]
    %v363 = vld [vmem:[%s352 + $0x50] sm:$0xff]
    %v364 = vld [vmem:[%s352 + $0x58] sm:$0xff]
    %v365 = vld [vmem:[%s352 + $0x60] sm:$0xff]
    %v366 = vld [vmem:[%s352 + $0x68] sm:$0xff]
    %v367 = vld [vmem:[%s352 + $0x70] sm:$0xff]
    %v368 = vld [vmem:[%s352 + $0x78] sm:$0xff]
    %s369 = scalar_lea.vmem %s4, 2
    %v370 = vld [vmem:[%s369] sm:$0x1]
    %v372 = vlaneseq
    %v373 = vshrl.u32 %v372, 7
    %v374 = vsub.s32 0, %v373
    %v375 = vrot.slane %v370, %v374
    %377 = vmatprep.subr.mxu0 0.0
    %378 = vmatpush1.msra.mxu0 %v368
    %379 = vmatprep.subr.mxu0 0.0
    %380 = vmatpush1.msra.mxu0 %v367
    %381 = vmatprep.subr.mxu0 0.0
    %382 = vmatpush1.msra.mxu0 %v366
    %383 = vmatprep.subr.mxu0 0.0
    %384 = vmatpush1.msra.mxu0 %v365
    %385 = vmatprep.subr.mxu0 0.0
    %386 = vmatpush1.msra.mxu0 %v364
    %387 = vmatprep.subr.mxu0 0.0
    %388 = vmatpush1.msra.mxu0 %v363
    %389 = vmatprep.subr.mxu0 0.0
    %390 = vmatpush1.msra.mxu0 %v362
    %391 = vmatprep.subr.mxu0 0.0
    %392 = vmatpush1.msra.mxu0 %v361
    %393 = vmatprep.subr.mxu0 0.0
    %394 = vmatpush1.msra.mxu0 %v360
    %395 = vmatprep.subr.mxu0 0.0
    %396 = vmatpush1.msra.mxu0 %v359
    %397 = vmatprep.subr.mxu0 0.0
    %398 = vmatpush1.msra.mxu0 %v358
    %399 = vmatprep.subr.mxu0 0.0
    %400 = vmatpush1.msra.mxu0 %v357
    %401 = vmatprep.subr.mxu0 0.0
    %402 = vmatpush1.msra.mxu0 %v356
    %403 = vmatprep.subr.mxu0 0.0
    %404 = vmatpush1.msra.mxu0 %v355
    %405 = vmatprep.subr.mxu0 0.0
    %406 = vmatpush1.msra.mxu0 %v354
    %407 = vmatprep.subr.mxu0 0.0
    %408 = vmatpush1.msra.mxu0 %v353
    %409 = vmatprep.subr.mxu0 0.0
    %410 = vmatpush2.msra.mxu0 0.0
    %411 = vmatprep.subr.mxu0 0.0
    %412 = vmatpush2.msra.mxu0 0.0
    %413 = vmatprep.subr.mxu0 0.0
    %414 = vmatpush2.msra.mxu0 0.0
    %415 = vmatprep.subr.mxu0 0.0
    %416 = vmatpush2.msra.mxu0 0.0
    %417 = vmatprep.subr.mxu0 0.0
    %418 = vmatpush2.msra.mxu0 0.0
    %419 = vmatprep.subr.mxu0 0.0
    %420 = vmatpush2.msra.mxu0 0.0
    %421 = vmatprep.subr.mxu0 0.0
    %422 = vmatpush2.msra.mxu0 0.0
    %423 = vmatprep.subr.mxu0 0.0
    %424 = vmatpush2.msra.mxu0 0.0
    %425 = vmatprep.subr.mxu0 0.0
    %426 = vmatpush2.msra.mxu0 0.0
    %427 = vmatprep.subr.mxu0 0.0
    %428 = vmatpush2.msra.mxu0 0.0
    %429 = vmatprep.subr.mxu0 0.0
    %430 = vmatpush2.msra.mxu0 0.0
    %431 = vmatprep.subr.mxu0 0.0
    %432 = vmatpush2.msra.mxu0 0.0
    %433 = vmatprep.subr.mxu0 0.0
    %434 = vmatpush2.msra.mxu0 0.0
    %435 = vmatprep.subr.mxu0 0.0
    %436 = vmatpush2.msra.mxu0 0.0
    %437 = vmatprep.subr.mxu0 0.0
    %438 = vmatpush2.msra.mxu0 0.0
    %439 = vmatprep.subr.mxu0 0.0
    %440 = vmatpush2.msra.mxu0 0.0
    %441 = vmatprep.mubr.f32.mxu0 0.0
    %442 = vmatmul.mubr.f32.gmra.mxu0 %v351
    %v443 = vpop.f32.mrf.mxu0
    %v444 = vadd.f32 %v375, %v443
    %v445 = vpop.f32.mrf.mxu0
    %446 = vdwg.mxu0
    %v447 = vtanh.pop %v444
    %v448 = vld [vmem:[#allocation6] sm:$0xff]
    %v449 = vld [vmem:[#allocation6 + $0x8] sm:$0xff]
    %v450 = vld [vmem:[#allocation6 + $0x10] sm:$0xff]
    %v451 = vld [vmem:[#allocation6 + $0x18] sm:$0xff]
    %v452 = vld [vmem:[#allocation6 + $0x20] sm:$0xff]
    %v453 = vld [vmem:[#allocation6 + $0x28] sm:$0xff]
    %v454 = vld [vmem:[#allocation6 + $0x30] sm:$0xff]
    %v455 = vld [vmem:[#allocation6 + $0x38] sm:$0xff]
    %v456 = vld [vmem:[#allocation6 + $0x40] sm:$0xff]
    %v457 = vld [vmem:[#allocation6 + $0x48] sm:$0xff]
    %v458 = vld [vmem:[#allocation6 + $0x50] sm:$0xff]
    %v459 = vld [vmem:[#allocation6 + $0x58] sm:$0xff]
    %v460 = vld [vmem:[#allocation6 + $0x60] sm:$0xff]
    %v461 = vld [vmem:[#allocation6 + $0x68] sm:$0xff]
    %v462 = vld [vmem:[#allocation6 + $0x70] sm:$0xff]
    %v463 = vld [vmem:[#allocation6 + $0x78] sm:$0xff]
    %v464 = vld [vmem:[%s6] sm:$0x1]
    %v466 = vlaneseq
    %v467 = vshrl.u32 %v466, 7
    %v468 = vsub.s32 0, %v467
    %v469 = vrot.slane %v464, %v468
    %471 = vmatprep.subr.mxu0 0.0
    %472 = vmatpush1.msra.mxu0 %v463
    %473 = vmatprep.subr.mxu0 0.0
    %474 = vmatpush1.msra.mxu0 %v462
    %475 = vmatprep.subr.mxu0 0.0
    %476 = vmatpush1.msra.mxu0 %v461
    %477 = vmatprep.subr.mxu0 0.0
    %478 = vmatpush1.msra.mxu0 %v460
    %479 = vmatprep.subr.mxu0 0.0
    %480 = vmatpush1.msra.mxu0 %v459
    %481 = vmatprep.subr.mxu0 0.0
    %482 = vmatpush1.msra.mxu0 %v458
    %483 = vmatprep.subr.mxu0 0.0
    %484 = vmatpush1.msra.mxu0 %v457
    %485 = vmatprep.subr.mxu0 0.0
    %486 = vmatpush1.msra.mxu0 %v456
    %487 = vmatprep.subr.mxu0 0.0
    %488 = vmatpush1.msra.mxu0 %v455
    %489 = vmatprep.subr.mxu0 0.0
    %490 = vmatpush1.msra.mxu0 %v454
    %491 = vmatprep.subr.mxu0 0.0
    %492 = vmatpush1.msra.mxu0 %v453
    %493 = vmatprep.subr.mxu0 0.0
    %494 = vmatpush1.msra.mxu0 %v452
    %495 = vmatprep.subr.mxu0 0.0
    %496 = vmatpush1.msra.mxu0 %v451
    %497 = vmatprep.subr.mxu0 0.0
    %498 = vmatpush1.msra.mxu0 %v450
    %499 = vmatprep.subr.mxu0 0.0
    %500 = vmatpush1.msra.mxu0 %v449
    %501 = vmatprep.subr.mxu0 0.0
    %502 = vmatpush1.msra.mxu0 %v448
    %503 = vmatprep.subr.mxu0 0.0
    %504 = vmatpush2.msra.mxu0 0.0
    %505 = vmatprep.subr.mxu0 0.0
    %506 = vmatpush2.msra.mxu0 0.0
    %507 = vmatprep.subr.mxu0 0.0
    %508 = vmatpush2.msra.mxu0 0.0
    %509 = vmatprep.subr.mxu0 0.0
    %510 = vmatpush2.msra.mxu0 0.0
    %511 = vmatprep.subr.mxu0 0.0
    %512 = vmatpush2.msra.mxu0 0.0
    %513 = vmatprep.subr.mxu0 0.0
    %514 = vmatpush2.msra.mxu0 0.0
    %515 = vmatprep.subr.mxu0 0.0
    %516 = vmatpush2.msra.mxu0 0.0
    %517 = vmatprep.subr.mxu0 0.0
    %518 = vmatpush2.msra.mxu0 0.0
    %519 = vmatprep.subr.mxu0 0.0
    %520 = vmatpush2.msra.mxu0 0.0
    %521 = vmatprep.subr.mxu0 0.0
    %522 = vmatpush2.msra.mxu0 0.0
    %523 = vmatprep.subr.mxu0 0.0
    %524 = vmatpush2.msra.mxu0 0.0
    %525 = vmatprep.subr.mxu0 0.0
    %526 = vmatpush2.msra.mxu0 0.0
    %527 = vmatprep.subr.mxu0 0.0
    %528 = vmatpush2.msra.mxu0 0.0
    %529 = vmatprep.subr.mxu0 0.0
    %530 = vmatpush2.msra.mxu0 0.0
    %531 = vmatprep.subr.mxu0 0.0
    %532 = vmatpush2.msra.mxu0 0.0
    %533 = vmatprep.subr.mxu0 0.0
    %534 = vmatpush2.msra.mxu0 0.0
    %535 = vmatprep.mubr.f32.mxu0 0.0
    %536 = vmatmul.mubr.f32.gmra.mxu0 %v447
    %v537 = vpop.f32.mrf.mxu0
    %v538 = vadd.f32 %v469, %v537
    %v539 = vpop.f32.mrf.mxu0
    %540 = vdwg.mxu0
    %541 = vst [vmem:[%s7] sm:$0xff] %v538
    // Predicated region
    $region42: #{nn1_forward.1} parent=1 // pred_check
      _
    $region43: #{nn1_forward.1} parent=1 // pred_check_branch
      %543 = sbr.rel (0) target = $region45
    $region44: #{nn1_forward.1} parent=1 // pred_region
      _
    $region45: #{nn1_forward.1} parent=1 // pred_fallthru
      _
    // Predicated region
    $region46: #{nn1_forward.1} parent=1 // pred_check
      _
    $region47: #{nn1_forward.1} parent=1 // pred_check_branch
      %545 = sbr.rel (0) target = $region49
    $region48: #{nn1_forward.1} parent=1 // pred_region
      _
    $region49: #{nn1_forward.1} parent=1 // pred_fallthru
      _
    %546 = vsyncpa [#allocation3], 1
    %547 = vsyncpa [#allocation5], 1

</llo_original>
